<compile_context>
chip_gen: v7x
topology: tpu7x:2x2x1
jax: 0.10.0
libtpu: 0.0.40
codegen_flags: <defaults>
</compile_context>

<pallas_src>
import math
import jax
import jax.numpy as jnp
from jax.experimental import pallas as pl
from jax.experimental.pallas import tpu as pltpu


# ----------------------------------------------------------------------------
# One-time init: sinusoidal table (matches the PyTorch buffer exactly)
# ----------------------------------------------------------------------------

def make_sinusoidal_pe(max_len, hidden_dim, dtype=jnp.float32):
    """pe[l, 0::2] = sin(l * div), pe[l, 1::2] = cos(l * div)  (hidden_dim even)."""
    position = jnp.arange(max_len, dtype=jnp.float32)[:, None]                  # (L, 1)
    div_term = jnp.exp(jnp.arange(0, hidden_dim, 2, dtype=jnp.float32)
                       * (-(math.log(10000.0) / hidden_dim)))                   # (H/2,)
    angles = position * div_term[None, :]                                       # (L, H/2)
    pe = jnp.zeros((max_len, hidden_dim), jnp.float32)
    pe = pe.at[:, 0::2].set(jnp.sin(angles))
    pe = pe.at[:, 1::2].set(jnp.cos(angles))
    return pe.astype(dtype)                                                     # (L, H)


# ----------------------------------------------------------------------------
# Pallas kernel: fused broadcast add  out[b, t, :] = x[b, t, :] + pe[t, :]
# ----------------------------------------------------------------------------

def _add_pe_kernel(x_ref, pe_ref, o_ref):
    # x_ref: (bb, tb, H), pe_ref: (tb, H) -> broadcasts over the leading batch dim.
    # Full-H last dim => unmasked lane-dense stores; pure VPU add, no XLU traffic.
    o_ref[...] = (x_ref[...] + pe_ref[...]).astype(o_ref.dtype)


def _vmem_limit_bytes():
    """Device-derived scoped-VMEM limit (half of physical, capped at 64 MiB)."""
    try:
        cap = pltpu.get_tpu_info().vmem_capacity_bytes
    except Exception:
        cap = 64 << 20                      # conservative fallback -> 32 MiB limit
    return int(min(cap // 2, 64 << 20))


def _plan_blocks(B, T, H, itemsize, budget_bytes):
    """Pick (bb, tb): batch/seq block sizes.

    Live VMEM ~= double-buffer * (x tile + out tile + pe tile)
              = 2 * (2*bb + 1) * tb * H * itemsize.
    tb stays a multiple of the dtype sublane granule (8 f32 / 16 bf16 / 32 int8)
    so packed layouts keep full-width loads/stores; bb is grown afterwards to
    fold as much of the batch as fits (fewer, larger DMAs -> less per-step overhead).
    """
    granule = max(8, 32 // itemsize)

    def live_bytes(bb, tb):
        return 2 * (2 * bb + 1) * tb * H * itemsize

    if T < granule:
        tb = T                                          # full-extent seq block (tiny T)
    else:
        tb = (T // granule) * granule                   # largest granule multiple <= T
        while tb > granule and live_bytes(1, tb) > budget_bytes:
            tb = max(granule, ((tb // 2) // granule) * granule)

    bb = 1
    while bb < B and live_bytes(min(2 * bb, B), tb) <= budget_bytes:
        bb = min(2 * bb, B)
    return bb, tb


def positional_encoding_fwd(x, pe, *, donate_x=False):
    """x: (B, T, H); pe: (max_len, H).  Returns x + pe[:T][None, :, :]."""
    B, T, H = x.shape
    max_len, Hp = pe.shape
    assert T <= max_len and H == Hp, (x.shape, pe.shape)
    if pe.dtype != x.dtype:
        # Fallback only; store the buffer in the model dtype at init to avoid this pass.
        pe = pe.astype(x.dtype)

    itemsize = jnp.dtype(x.dtype).itemsize
    vmem_limit = _vmem_limit_bytes()
    bb, tb = _plan_blocks(B, T, H, itemsize, int(vmem_limit * 0.6))

    # Pass the full pe buffer when the seq block obeys the (8, 128) sublane rule (the
    # index_map then only touches the first ceil(T/tb) blocks).  Only for tiny T below
    # the sublane granule do we slice so the block is full-extent and stays legal.
    if tb % 8 != 0:
        pe = pe[:T]

    # Seq axis OUTER, batch axis INNER: pe's block index depends only on the seq index,
    # so the pe tile is DMA'd once per seq tile and re-used across all batch steps.
    grid = (pl.cdiv(T, tb), pl.cdiv(B, bb))

    return pl.pallas_call(
        _add_pe_kernel,
        out_shape=jax.ShapeDtypeStruct((B, T, H), x.dtype),
        grid=grid,
        in_specs=[pl.BlockSpec((bb, tb, H), lambda t, b: (b, t, 0)),
                  pl.BlockSpec((tb, H), lambda t, b: (t, 0))],
        out_specs=pl.BlockSpec((bb, tb, H), lambda t, b: (b, t, 0)),
        input_output_aliases=({0: 0} if donate_x else {}),
        compiler_params=pltpu.CompilerParams(
            dimension_semantics=("parallel", "parallel"),
            vmem_limit_bytes=vmem_limit),
    )(x, pe)


class PositionalEncoding:
    """JAX/Pallas mirror of the PyTorch module: buffer built at init, add at forward."""

    def __init__(self, hidden_dim, max_len, dtype=jnp.float32):
        # Buffer stored directly in the model dtype -> no per-call slice/cast pass.
        self.pe = make_sinusoidal_pe(max_len, hidden_dim, dtype)   # (max_len, hidden_dim)

    def __call__(self, x):
        return positional_encoding_fwd(x, self.pe)


# ----------------------------------------------------------------------------

if __name__ == "__main__":
    B, T, H, MAX_LEN = 2, 16, 128, 64
    key = jax.random.PRNGKey(0)
    x = jax.random.normal(key, (B, T, H), jnp.float32)

    module = PositionalEncoding(hidden_dim=H, max_len=MAX_LEN)
    out = jax.block_until_ready(module(x))

    # correctness check against the plain-JAX reference (PyTorch forward semantics)
    ref = x + module.pe[None, :T, :]
    assert out.shape == (B, T, H), out.shape
    assert bool(jnp.all(jnp.isfinite(out)))
    assert bool(jnp.allclose(out, ref, atol=1e-6, rtol=1e-6))
    print("KERNEL_OK")
</pallas_src>

<mosaic_0001>
module attributes {stable_mosaic.version = 11 : i64} {
  func.func @_add_pe_kernel(%arg0: i32, %arg1: i32, %arg2: memref<2x16x128xf32, #tpu.memory_space<vmem>>, %arg3: memref<16x128xf32, #tpu.memory_space<vmem>>, %arg4: memref<2x16x128xf32, #tpu.memory_space<vmem>>) attributes {dimension_semantics = [#tpu.dimension_semantics<parallel>, #tpu.dimension_semantics<parallel>], iteration_bounds = array<i64: 1, 1>, scalar_prefetch = 0 : i64, scratch_operands = 0 : i64, tpu.core_type = #tpu.core_type<tc>, window_params = [{transform_indices = @transform_0, window_bounds = array<i64: 2, 16, 128>}, {transform_indices = @transform_1, window_bounds = array<i64: 16, 128>}, {transform_indices = @transform_2, window_bounds = array<i64: 2, 16, 128>}]} {
    %c0 = arith.constant 0 : index
    %c0_0 = arith.constant 0 : index
    %c0_1 = arith.constant 0 : index
    %0 = vector.load %arg2[%c0, %c0_0, %c0_1] : memref<2x16x128xf32, #tpu.memory_space<vmem>>, vector<2x16x128xf32>
    %c0_2 = arith.constant 0 : index
    %c0_3 = arith.constant 0 : index
    %1 = vector.load %arg3[%c0_2, %c0_3] : memref<16x128xf32, #tpu.memory_space<vmem>>, vector<16x128xf32>
    %2 = vector.shape_cast %1 : vector<16x128xf32> to vector<1x16x128xf32>
    %3 = vector.broadcast %2 : vector<1x16x128xf32> to vector<2x16x128xf32>
    %4 = arith.addf %0, %3 : vector<2x16x128xf32>
    %c0_4 = arith.constant 0 : index
    %c0_5 = arith.constant 0 : index
    %c0_6 = arith.constant 0 : index
    %5 = vector.load %arg4[%c0_4, %c0_5, %c0_6] : memref<2x16x128xf32, #tpu.memory_space<vmem>>, vector<2x16x128xf32>
    tpu.vector_store %arg4[%c0_4, %c0_5, %c0_6], %4 {strides = array<i32>} : memref<2x16x128xf32, #tpu.memory_space<vmem>>, vector<2x16x128xf32>,
    return
  }
  func.func @transform_0(%arg0: i32, %arg1: i32) -> (i32, i32, i32) {
    %c0_i32 = arith.constant 0 : i32
    %c0_i32_0 = arith.constant 0 : i32
    return %arg1, %arg0, %c0_i32 : i32, i32, i32
  }
  func.func @transform_1(%arg0: i32, %arg1: i32) -> (i32, i32) {
    %c0_i32 = arith.constant 0 : i32
    %c0_i32_0 = arith.constant 0 : i32
    return %arg0, %c0_i32 : i32, i32
  }
  func.func @transform_2(%arg0: i32, %arg1: i32) -> (i32, i32, i32) {
    %c0_i32 = arith.constant 0 : i32
    %c0_i32_0 = arith.constant 0 : i32
    return %arg1, %arg0, %c0_i32 : i32, i32, i32
  }
}

</mosaic_0001>

<llo_original>
// kernel: tpu_custom_call.1
$region0: #{tpu_custom_call.1}
  #allocation0 [shape = 'u32[]', space=smem, size = 0x4, offset = 0x4, fixed_abs, tag = 'smem constant byte address 0x4 - core index']
  #allocation1 [shape = 'u32[144,128]{1,0:T(1,128)}', space=vmem, size = 0x12000, scoped, tag = 'internal scratch']
  %s0 = inlined_call_operand.hbm [shape: f32[2,16,128], index: 0, kind: input, shape index: {}]
  %s1 = inlined_call_operand.hbm [shape: f32[64,128], index: 1, kind: input, shape index: {}]
  %s2 = inlined_call_operand.hbm [shape: f32[2,16,128], index: 2, kind: output, shape index: {}]
  %s3 = sld [smem:[#allocation0]]
  $region26: #{tpu_custom_call.1} parent=0
    _
  %s5 = ssub.s32 1, %s3
  %s6 = scalar_select 0, %s5, %s3
  $region1: #{tpu_custom_call.1} parent=0
    #allocation2 [shape = 'u8[16384]{0}', space=vmem, size = 0x4000, scoped, tag = 'input window, operand 0, single buffered']
    #allocation3 [shape = 's32[1]{0}', space=sflag, size = 0x4, scoped, tag = 'scoped memory for tpu_custom_call.1']
    #allocation4 [shape = 's32[1]{0}', space=sflag, size = 0x4, scoped, tag = 'scoped memory for tpu_custom_call.1']
    #allocation5 [shape = 'u8[8192]{0}', space=vmem, size = 0x2000, scoped, tag = 'input window, operand 1, single buffered']
    #allocation6 [shape = 's32[1]{0}', space=sflag, size = 0x4, scoped, tag = 'scoped memory for tpu_custom_call.1']
    #allocation7 [shape = 'u8[16384]{0}', space=vmem, size = 0x4000, scoped, tag = 'output window, operand 0, single buffered']
    %7 = vsyncpa [#allocation3], 0
    %8 = vsyncpa [#allocation6], 0
    %9 = vsyncpa [#allocation4], 0
    // Predicated region
    $region2: #{tpu_custom_call.1} parent=1 // pred_check
      _
    $region3: #{tpu_custom_call.1} parent=1 // pred_check_branch
      %11 = sbr.rel (0) target = $region5
    $region4: #{tpu_custom_call.1} parent=1 // pred_region
      %s13 = ssub.s32 512, 512
      %14 = vsyncadd [#allocation3], %s13
      %s15 = sshll.u32 [#allocation2], 4
      %s16 = int_to_ptr.vmem [resolvable:$true] %s15
      %21 = dma.hbm_to_vmem [thread:$0]  %s0, 512, %s16, [#allocation3], 128, 128, 8
    $region5: #{tpu_custom_call.1} parent=1 // pred_fallthru
      _
    // Predicated region
    $region6: #{tpu_custom_call.1} parent=1 // pred_check
      _
    $region7: #{tpu_custom_call.1} parent=1 // pred_check_branch
      %23 = sbr.rel (0) target = $region9
    $region8: #{tpu_custom_call.1} parent=1 // pred_region
      %s25 = ssub.s32 256, 256
      %26 = vsyncadd [#allocation6], %s25
      %s27 = sshll.u32 [#allocation5], 4
      %s28 = int_to_ptr.vmem [resolvable:$true] %s27
      %33 = dma.hbm_to_vmem [thread:$0]  %s1, 256, %s28, [#allocation6], 128, 128, 8
    $region9: #{tpu_custom_call.1} parent=1 // pred_fallthru
      _
    // Predicated region
    $region10: #{tpu_custom_call.1} parent=1 // pred_check
      _
    $region11: #{tpu_custom_call.1} parent=1 // pred_check_branch
      %35 = sbr.rel (0) target = $region13
    $region12: #{tpu_custom_call.1} parent=1 // pred_region
      %36 = dma.done [#allocation3], 512
    $region13: #{tpu_custom_call.1} parent=1 // pred_fallthru
      _
    // Predicated region
    $region14: #{tpu_custom_call.1} parent=1 // pred_check
      _
    $region15: #{tpu_custom_call.1} parent=1 // pred_check_branch
      %38 = sbr.rel (0) target = $region17
    $region16: #{tpu_custom_call.1} parent=1 // pred_region
      %39 = dma.done [#allocation6], 256
    $region17: #{tpu_custom_call.1} parent=1 // pred_fallthru
      _
    %v40 = vld [vmem:[#allocation2] sm:$0xff]
    %v41 = vld [vmem:[#allocation2 + $0x8] sm:$0xff]
    %v42 = vld [vmem:[#allocation2 + $0x10] sm:$0xff]
    %v43 = vld [vmem:[#allocation2 + $0x18] sm:$0xff]
    %v44 = vld [vmem:[#allocation5] sm:$0xff]
    %v45 = vld [vmem:[#allocation5 + $0x8] sm:$0xff]
    %v46 = vadd.f32 %v40, %v44
    %v47 = vadd.f32 %v41, %v45
    %v48 = vadd.f32 %v42, %v44
    %v49 = vadd.f32 %v43, %v45
    %50 = vst [vmem:[#allocation7] sm:$0xff] %v46
    %51 = vst [vmem:[#allocation7 + $0x8] sm:$0xff] %v47
    %52 = vst [vmem:[#allocation7 + $0x10] sm:$0xff] %v48
    %53 = vst [vmem:[#allocation7 + $0x18] sm:$0xff] %v49
    // Predicated region
    $region18: #{tpu_custom_call.1} parent=1 // pred_check
      _
    $region19: #{tpu_custom_call.1} parent=1 // pred_check_branch
      %55 = sbr.rel (0) target = $region21
    $region20: #{tpu_custom_call.1} parent=1 // pred_region
      %s57 = ssub.s32 512, 512
      %58 = vsyncadd [#allocation4], %s57
      %s59 = sshll.u32 [#allocation7], 4
      %s60 = int_to_ptr.vmem [resolvable:$true] %s59
      %65 = dma.vmem_to_hbm [thread:$0]  %s60, 512, %s2, [#allocation4], 128, 128, 8
    $region21: #{tpu_custom_call.1} parent=1 // pred_fallthru
      _
    // Predicated region
    $region22: #{tpu_custom_call.1} parent=1 // pred_check
      _
    $region23: #{tpu_custom_call.1} parent=1 // pred_check_branch
      %67 = sbr.rel (0) target = $region25
    $region24: #{tpu_custom_call.1} parent=1 // pred_region
      %68 = dma.done [#allocation4], 512
    $region25: #{tpu_custom_call.1} parent=1 // pred_fallthru
      _
    %69 = vsyncpa [#allocation3], 1
    %70 = vsyncpa [#allocation6], 1
    %71 = vsyncpa [#allocation4], 1

</llo_original>
